<compile_context>
chip_gen: v5e
topology: v5e:2x2
jax: 0.10.0
libtpu: 0.0.40
codegen_flags: <defaults>
</compile_context>

<pallas_src>
import functools

import jax
import jax.numpy as jnp
from jax.experimental import pallas as pl
from jax.experimental.pallas import tpu as pltpu


def _model_kernel(alphas_ref, betas_ref, gammas_ref,   # SMEM (n_lin,) f32 scalars
                  x_ref,                               # (Bc*F, n_fft) f32 frames
                  rcat_ref,                            # (n_fft, M*n_fft) bf16  [R_0^T | ... | R_{M-1}^T]
                  out_ref,                             # (Bc*F, n_fft) f32
                  *, num_matrices, n_lin, n_frames, n_fft, batch_per_step):
    X = x_ref[...]                                     # f32, kept exact for the residual add

    # ---- Resonator (folded): one wide MXU push  S = X @ [R_0^T | ... | R_{M-1}^T] ----
    S = jnp.dot(X.astype(jnp.bfloat16), rcat_ref[...],
                preferred_element_type=jnp.float32)    # (Bc*F, M*n_fft) f32

    # ---- frame shifts: y[b, f, :] = sum_i S_i[b, (f + i) % F, :]  (roll within each batch) ----
    # jnp.roll(chunk, -i, axis=0) == pltpu.roll(chunk, (F - i) % F, axis=0)  (sublane rotate).
    y_blocks = []
    for b in range(batch_per_step):                    # static unroll; Bc is small
        Sb = S[b * n_frames:(b + 1) * n_frames, :]     # sublane-aligned static slice
        acc = Sb[:, 0:n_fft]
        for i in range(1, num_matrices):
            chunk = Sb[:, i * n_fft:(i + 1) * n_fft]   # 128-lane-aligned static slice
            shift = (n_frames - i) % n_frames
            if shift:
                chunk = pltpu.roll(chunk, shift=shift, axis=0)   # XLU rotate (free vs MXU)
            acc = acc + chunk
        y_blocks.append(acc)
    y = y_blocks[0] if batch_per_step == 1 else jnp.concatenate(y_blocks, axis=0)

    # ---- Lineator: sum_j alpha_j * tanh(beta_j * y + gamma_j)  (EUP work, f32) ----
    alphas = [alphas_ref[j] for j in range(n_lin)]     # scalar SMEM reads, hoisted
    betas = [betas_ref[j] for j in range(n_lin)]
    gammas = [gammas_ref[j] for j in range(n_lin)]
    lin = alphas[0] * jnp.tanh(betas[0] * y + gammas[0])
    for j in range(1, n_lin):
        lin = lin + alphas[j] * jnp.tanh(betas[j] * y + gammas[j])

    # ---- residual add (identity kept in full f32 precision) ----
    out_ref[...] = lin + X


@functools.partial(jax.jit, static_argnames=("n_fft",))
def model_forward(x, alphas, betas, gammas, A, *, n_fft):
    """x: (B, 1, T) float32; A: (num_matrices, n_fft, n_fft) complex64."""
    B, C, T = x.shape
    assert C == 1 and T % n_fft == 0
    F = T // n_fft
    M = A.shape[0]
    n_lin = alphas.shape[0]

    # Up to 2 "parallel" grid steps (feeds both v7x TensorCores); batches merged
    # into the matmul row dimension within each step.
    G = 2 if (B >= 2 and B % 2 == 0) else 1
    Bc = B // G
    rows = Bc * F

    frames = x.reshape(B * F, n_fft).astype(jnp.float32)          # (B*F, n_fft)

    # Fold stft -> A_i -> istft.real into real matrices R_i = Re(V @ A_i @ W).
    # DFT/iDFT constants depend only on static n_fft; the (tiny) complex64
    # products are done once per call here (cache them in a real model).
    k = jnp.arange(n_fft)
    ang = 2.0 * jnp.pi * jnp.outer(k, k) / n_fft
    W = jnp.exp(-1j * ang).astype(jnp.complex64)                  # DFT
    V = (jnp.exp(+1j * ang) / n_fft).astype(jnp.complex64)        # inverse DFT
    VA = jnp.einsum('mk,ikl->iml', V, A.astype(jnp.complex64))    # (M, n, n) complex
    R = jnp.real(jnp.einsum('iml,ln->imn', VA, W))                # (M, n, n) f32, R[i] = Re(V A_i W)
    # Rcat[:, i*n:(i+1)*n] = R_i^T  -> single wide-N bf16 RHS for one MXU push.
    Rcat = jnp.transpose(R, (2, 0, 1)).reshape(n_fft, M * n_fft).astype(jnp.bfloat16)

    kernel = functools.partial(_model_kernel, num_matrices=M, n_lin=n_lin,
                               n_frames=F, n_fft=n_fft, batch_per_step=Bc)

    smem_spec = pl.BlockSpec(memory_space=pltpu.MemorySpace.SMEM)
    row_spec = pl.BlockSpec((rows, n_fft), lambda g: (g, 0))
    # Constant-index weight block (~96 KiB bf16 at n_fft=128).  When scaling
    # n_fft: single-buffer it (pipeline_mode=pl.Buffered(1)) or stream R_i tiles.
    rcat_spec = pl.BlockSpec((n_fft, M * n_fft), lambda g: (0, 0))

    out_rows = pl.pallas_call(
        kernel,
        grid=(G,),
        in_specs=[smem_spec, smem_spec, smem_spec, row_spec, rcat_spec],
        out_specs=row_spec,
        out_shape=jax.ShapeDtypeStruct((B * F, n_fft), jnp.float32),
        compiler_params=pltpu.CompilerParams(dimension_semantics=("parallel",)),
    )(alphas.astype(jnp.float32), betas.astype(jnp.float32), gammas.astype(jnp.float32),
      frames, Rcat)

    return out_rows.reshape(B, 1, T)


def reference_model(x, alphas, betas, gammas, A, n_fft):
    """Pure-JAX (f32/complex64) mirror of the PyTorch Model.forward."""
    B, C, T = x.shape
    F = T // n_fft
    k = jnp.arange(n_fft)
    ang = 2.0 * jnp.pi * jnp.outer(k, k) / n_fft
    W = jnp.exp(-1j * ang).astype(jnp.complex64)
    V = (jnp.exp(+1j * ang) / n_fft).astype(jnp.complex64)

    frames = x.reshape(B, F, n_fft).astype(jnp.complex64)
    spec = jnp.einsum('km,bfm->bkf', W, frames)                  # (B, n_fft, F)
    shifted = jnp.zeros_like(spec)
    for i in range(A.shape[0]):
        s = jnp.einsum('kl,blf->bkf', A[i], spec)
        shifted = shifted + jnp.roll(s, -i, axis=2)              # torch.roll(..., -i, dims=2)
    yf = jnp.real(jnp.einsum('mk,bkf->bmf', V, shifted))         # istft(...).real
    y = jnp.transpose(yf, (0, 2, 1)).reshape(B, 1, T)

    lin = jnp.sum(alphas[None, :, None]
                  * jnp.tanh(betas[None, :, None] * y + gammas[None, :, None]),
                  axis=1, keepdims=True)
    return lin + x


if __name__ == "__main__":
    B, T = 4, 2048
    n_fft = 128
    num_matrices = 3
    n_lin = 5            # Lineator hard-codes broadcast_to(1, 5, T) -> n must be 5

    key = jax.random.PRNGKey(0)
    k1, k2, k3, k4, k5, k6 = jax.random.split(key, 6)
    alphas = jax.random.normal(k1, (n_lin,), jnp.float32) / 100.0
    betas = jax.random.normal(k2, (n_lin,), jnp.float32) / 100.0
    gammas = jax.random.normal(k3, (n_lin,), jnp.float32) / 100.0
    A = ((jax.random.normal(k4, (num_matrices, n_fft, n_fft), jnp.float32)
          + 1j * jax.random.normal(k5, (num_matrices, n_fft, n_fft), jnp.float32))
         / 100.0).astype(jnp.complex64)
    x = jax.random.normal(k6, (B, 1, T), jnp.float32)

    out = jax.block_until_ready(model_forward(x, alphas, betas, gammas, A, n_fft=n_fft))

    ref = reference_model(x, alphas, betas, gammas, A, n_fft)
    assert out.shape == (B, 1, T), out.shape
    max_err = float(jnp.max(jnp.abs(out - ref)))
    assert jnp.allclose(out, ref, atol=1e-3, rtol=1e-3), max_err
    print("KERNEL_OK")
</pallas_src>

<mosaic_0001>
module attributes {stable_mosaic.version = 11 : i64} {
  func.func @_model_kernel(%arg0: i32, %arg1: memref<5xf32, #tpu.memory_space<smem>>, %arg2: memref<5xf32, #tpu.memory_space<smem>>, %arg3: memref<5xf32, #tpu.memory_space<smem>>, %arg4: memref<32x128xf32, #tpu.memory_space<vmem>>, %arg5: memref<128x384xbf16, #tpu.memory_space<vmem>>, %arg6: memref<32x128xf32, #tpu.memory_space<vmem>>) attributes {dimension_semantics = [#tpu.dimension_semantics<parallel>], iteration_bounds = array<i64: 2>, scalar_prefetch = 0 : i64, scratch_operands = 0 : i64, tpu.core_type = #tpu.core_type<tc>, window_params = [{transform_indices = @transform_0, window_bounds = array<i64: 5>}, {transform_indices = @transform_1, window_bounds = array<i64: 5>}, {transform_indices = @transform_2, window_bounds = array<i64: 5>}, {transform_indices = @transform_3, window_bounds = array<i64: 32, 128>}, {pipeline_mode = #tpu.pipeline_mode<synchronous>, transform_indices = @transform_4, window_bounds = array<i64: 128, 384>}, {transform_indices = @transform_5, window_bounds = array<i64: 32, 128>}]} {
    %c0 = arith.constant 0 : index
    %c0_0 = arith.constant 0 : index
    %0 = vector.load %arg4[%c0, %c0_0] : memref<32x128xf32, #tpu.memory_space<vmem>>, vector<32x128xf32>
    %1 = arith.truncf %0 : vector<32x128xf32> to vector<32x128xbf16>
    %c0_1 = arith.constant 0 : index
    %c0_2 = arith.constant 0 : index
    %2 = vector.load %arg5[%c0_1, %c0_2] : memref<128x384xbf16, #tpu.memory_space<vmem>>, vector<128x384xbf16>
    %cst = arith.constant dense<0.000000e+00> : vector<32x384xf32>
    %3 = tpu.matmul %1, %2, %cst {dimension_numbers = #tpu.dot_dimension_numbers<[1], [0], [0], [1], [0, 0, 1, 1], [], []>} : vector<32x128xbf16>, vector<128x384xbf16>, vector<32x384xf32> -> vector<32x384xf32>
    %4 = vector.extract_strided_slice %3 {offsets = [0, 0], sizes = [16, 384], strides = [1, 1]} : vector<32x384xf32> to vector<16x384xf32>
    %5 = vector.extract_strided_slice %4 {offsets = [0, 0], sizes = [16, 128], strides = [1, 1]} : vector<16x384xf32> to vector<16x128xf32>
    %6 = vector.extract_strided_slice %4 {offsets = [0, 128], sizes = [16, 128], strides = [1, 1]} : vector<16x384xf32> to vector<16x128xf32>
    %c15_i32 = arith.constant 15 : i32
    %7 = tpu.dynamic_rotate %6 by %c15_i32 dim 0 : vector<16x128xf32>, i32 -> vector<16x128xf32>
    %8 = arith.addf %5, %7 : vector<16x128xf32>
    %9 = vector.extract_strided_slice %4 {offsets = [0, 256], sizes = [16, 128], strides = [1, 1]} : vector<16x384xf32> to vector<16x128xf32>
    %c14_i32 = arith.constant 14 : i32
    %10 = tpu.dynamic_rotate %9 by %c14_i32 dim 0 : vector<16x128xf32>, i32 -> vector<16x128xf32>
    %11 = arith.addf %8, %10 : vector<16x128xf32>
    %12 = vector.extract_strided_slice %3 {offsets = [16, 0], sizes = [16, 384], strides = [1, 1]} : vector<32x384xf32> to vector<16x384xf32>
    %13 = vector.extract_strided_slice %12 {offsets = [0, 0], sizes = [16, 128], strides = [1, 1]} : vector<16x384xf32> to vector<16x128xf32>
    %14 = vector.extract_strided_slice %12 {offsets = [0, 128], sizes = [16, 128], strides = [1, 1]} : vector<16x384xf32> to vector<16x128xf32>
    %c15_i32_3 = arith.constant 15 : i32
    %15 = tpu.dynamic_rotate %14 by %c15_i32_3 dim 0 : vector<16x128xf32>, i32 -> vector<16x128xf32>
    %16 = arith.addf %13, %15 : vector<16x128xf32>
    %17 = vector.extract_strided_slice %12 {offsets = [0, 256], sizes = [16, 128], strides = [1, 1]} : vector<16x384xf32> to vector<16x128xf32>
    %c14_i32_4 = arith.constant 14 : i32
    %18 = tpu.dynamic_rotate %17 by %c14_i32_4 dim 0 : vector<16x128xf32>, i32 -> vector<16x128xf32>
    %19 = arith.addf %16, %18 : vector<16x128xf32>
    %20 = tpu.concatenate %11, %19 in 0 : vector<16x128xf32>, vector<16x128xf32> -> vector<32x128xf32>
    %c0_5 = arith.constant 0 : index
    %21 = memref.load %arg1[%c0_5] : memref<5xf32, #tpu.memory_space<smem>>
    %c1 = arith.constant 1 : index
    %22 = memref.load %arg1[%c1] : memref<5xf32, #tpu.memory_space<smem>>
    %c2 = arith.constant 2 : index
    %23 = memref.load %arg1[%c2] : memref<5xf32, #tpu.memory_space<smem>>
    %c3 = arith.constant 3 : index
    %24 = memref.load %arg1[%c3] : memref<5xf32, #tpu.memory_space<smem>>
    %c4 = arith.constant 4 : index
    %25 = memref.load %arg1[%c4] : memref<5xf32, #tpu.memory_space<smem>>
    %c0_6 = arith.constant 0 : index
    %26 = memref.load %arg2[%c0_6] : memref<5xf32, #tpu.memory_space<smem>>
    %c1_7 = arith.constant 1 : index
    %27 = memref.load %arg2[%c1_7] : memref<5xf32, #tpu.memory_space<smem>>
    %c2_8 = arith.constant 2 : index
    %28 = memref.load %arg2[%c2_8] : memref<5xf32, #tpu.memory_space<smem>>
    %c3_9 = arith.constant 3 : index
    %29 = memref.load %arg2[%c3_9] : memref<5xf32, #tpu.memory_space<smem>>
    %c4_10 = arith.constant 4 : index
    %30 = memref.load %arg2[%c4_10] : memref<5xf32, #tpu.memory_space<smem>>
    %c0_11 = arith.constant 0 : index
    %31 = memref.load %arg3[%c0_11] : memref<5xf32, #tpu.memory_space<smem>>
    %c1_12 = arith.constant 1 : index
    %32 = memref.load %arg3[%c1_12] : memref<5xf32, #tpu.memory_space<smem>>
    %c2_13 = arith.constant 2 : index
    %33 = memref.load %arg3[%c2_13] : memref<5xf32, #tpu.memory_space<smem>>
    %c3_14 = arith.constant 3 : index
    %34 = memref.load %arg3[%c3_14] : memref<5xf32, #tpu.memory_space<smem>>
    %c4_15 = arith.constant 4 : index
    %35 = memref.load %arg3[%c4_15] : memref<5xf32, #tpu.memory_space<smem>>
    %36 = vector.broadcast %26 : f32 to vector<32x128xf32>
    %37 = arith.mulf %36, %20 : vector<32x128xf32>
    %38 = vector.broadcast %31 : f32 to vector<32x128xf32>
    %39 = arith.addf %37, %38 : vector<32x128xf32>
    %40 = math.tanh %39 : vector<32x128xf32>
    %41 = vector.broadcast %21 : f32 to vector<32x128xf32>
    %42 = arith.mulf %41, %40 : vector<32x128xf32>
    %43 = vector.broadcast %27 : f32 to vector<32x128xf32>
    %44 = arith.mulf %43, %20 : vector<32x128xf32>
    %45 = vector.broadcast %32 : f32 to vector<32x128xf32>
    %46 = arith.addf %44, %45 : vector<32x128xf32>
    %47 = math.tanh %46 : vector<32x128xf32>
    %48 = vector.broadcast %22 : f32 to vector<32x128xf32>
    %49 = arith.mulf %48, %47 : vector<32x128xf32>
    %50 = arith.addf %42, %49 : vector<32x128xf32>
    %51 = vector.broadcast %28 : f32 to vector<32x128xf32>
    %52 = arith.mulf %51, %20 : vector<32x128xf32>
    %53 = vector.broadcast %33 : f32 to vector<32x128xf32>
    %54 = arith.addf %52, %53 : vector<32x128xf32>
    %55 = math.tanh %54 : vector<32x128xf32>
    %56 = vector.broadcast %23 : f32 to vector<32x128xf32>
    %57 = arith.mulf %56, %55 : vector<32x128xf32>
    %58 = arith.addf %50, %57 : vector<32x128xf32>
    %59 = vector.broadcast %29 : f32 to vector<32x128xf32>
    %60 = arith.mulf %59, %20 : vector<32x128xf32>
    %61 = vector.broadcast %34 : f32 to vector<32x128xf32>
    %62 = arith.addf %60, %61 : vector<32x128xf32>
    %63 = math.tanh %62 : vector<32x128xf32>
    %64 = vector.broadcast %24 : f32 to vector<32x128xf32>
    %65 = arith.mulf %64, %63 : vector<32x128xf32>
    %66 = arith.addf %58, %65 : vector<32x128xf32>
    %67 = vector.broadcast %30 : f32 to vector<32x128xf32>
    %68 = arith.mulf %67, %20 : vector<32x128xf32>
    %69 = vector.broadcast %35 : f32 to vector<32x128xf32>
    %70 = arith.addf %68, %69 : vector<32x128xf32>
    %71 = math.tanh %70 : vector<32x128xf32>
    %72 = vector.broadcast %25 : f32 to vector<32x128xf32>
    %73 = arith.mulf %72, %71 : vector<32x128xf32>
    %74 = arith.addf %66, %73 : vector<32x128xf32>
    %75 = arith.addf %74, %0 : vector<32x128xf32>
    %c0_16 = arith.constant 0 : index
    %c0_17 = arith.constant 0 : index
    %76 = vector.load %arg6[%c0_16, %c0_17] : memref<32x128xf32, #tpu.memory_space<vmem>>, vector<32x128xf32>
    tpu.vector_store %arg6[%c0_16, %c0_17], %75 {strides = array<i32>} : memref<32x128xf32, #tpu.memory_space<vmem>>, vector<32x128xf32>,
    return
  }
  func.func @transform_0(%arg0: i32) -> i32 {
    %c0_i32 = arith.constant 0 : i32
    %c0_i32_0 = arith.constant 0 : i32
    return %c0_i32 : i32
  }
  func.func @transform_1(%arg0: i32) -> i32 {
    %c0_i32 = arith.constant 0 : i32
    %c0_i32_0 = arith.constant 0 : i32
    return %c0_i32 : i32
  }
  func.func @transform_2(%arg0: i32) -> i32 {
    %c0_i32 = arith.constant 0 : i32
    %c0_i32_0 = arith.constant 0 : i32
    return %c0_i32 : i32
  }
  func.func @transform_3(%arg0: i32) -> (i32, i32) {
    %c0_i32 = arith.constant 0 : i32
    %c0_i32_0 = arith.constant 0 : i32
    return %arg0, %c0_i32 : i32, i32
  }
  func.func @transform_4(%arg0: i32) -> (i32, i32) {
    %c0_i32 = arith.constant 0 : i32
    %c0_i32_0 = arith.constant 0 : i32
    %c0_i32_1 = arith.constant 0 : i32
    return %c0_i32, %c0_i32_0 : i32, i32
  }
  func.func @transform_5(%arg0: i32) -> (i32, i32) {
    %c0_i32 = arith.constant 0 : i32
    %c0_i32_0 = arith.constant 0 : i32
    return %arg0, %c0_i32 : i32, i32
  }
}

</mosaic_0001>

<llo_original>
// kernel: custom-call
$region0: #{custom-call}
  %s0 = inlined_call_operand.hbm [shape: c64[3,128,128], index: 0, kind: input, shape index: {}]
  %s1 = inlined_call_operand.vmem [shape: f32[3,128,128], index: 1, kind: output, shape index: {}]
  $region1: #{custom-call} parent=0
    #allocation0 [shape = 's32[1]{0}', space=sflag, size = 0x4, scoped, tag = 'scoped memory for custom-call']
    %2 = vsyncpa [#allocation0], 0
    %s4 = sshll.u32 %s0, 4
    %s5 = int_to_ptr.hbm [resolvable:$true] %s4
    %s6 = sshll.u32 %s1, 4
    %s7 = int_to_ptr.vmem [resolvable:$true] %s6
    %9 = dma.hbm_to_vmem [thread:$0]  %s5, 6144, %s7, [#allocation0]
    %11 = dma.done [#allocation0], 6144
    %12 = vsyncpa [#allocation0], 1

// kernel: custom-call.1
$region0: #{custom-call.1}
  %s0 = inlined_call_operand.hbm [shape: c64[3,128,128], index: 0, kind: input, shape index: {}]
  %s1 = inlined_call_operand.vmem [shape: f32[3,128,128], index: 1, kind: output, shape index: {}]
  %s2 = scalar_lea.hbm %s0, 384
  $region1: #{custom-call.1} parent=0
    #allocation0 [shape = 's32[1]{0}', space=sflag, size = 0x4, scoped, tag = 'scoped memory for custom-call.1']
    %3 = vsyncpa [#allocation0], 0
    %s5 = sshll.u32 %s2, 4
    %s6 = int_to_ptr.hbm [resolvable:$true] %s5
    %s7 = sshll.u32 %s1, 4
    %s8 = int_to_ptr.vmem [resolvable:$true] %s7
    %10 = dma.hbm_to_vmem [thread:$0]  %s6, 6144, %s8, [#allocation0]
    %12 = dma.done [#allocation0], 6144
    %13 = vsyncpa [#allocation0], 1

// kernel: model_forward.1
$region0: #{model_forward.1}
  #allocation0 [shape = 'u32[]', space=smem, size = 0x4, offset = 0x4, fixed_abs, tag = 'smem constant byte address 0x4 - core index']
  #allocation1 [shape = 'u32[72,128]{1,0:T(1,128)}', space=vmem, size = 0x9000, scoped, tag = 'internal scratch']
  %s0 = inlined_call_operand.vmem [shape: f32[5], index: 0, kind: input, shape index: {}]
  %s1 = inlined_call_operand.vmem [shape: f32[5], index: 1, kind: input, shape index: {}]
  %s2 = inlined_call_operand.vmem [shape: f32[5], index: 2, kind: input, shape index: {}]
  %s3 = inlined_call_operand.vmem [shape: f32[64,128], index: 3, kind: input, shape index: {}]
  %s4 = inlined_call_operand.vmem [shape: bf16[128,384], index: 4, kind: input, shape index: {}]
  %s5 = inlined_call_operand.hbm [shape: f32[64,128], index: 5, kind: output, shape index: {}]
  %s6 = sld [smem:[#allocation0]]
  $region65: #{model_forward.1} parent=0
    _
  %s8 = ssub.s32 1, %s6
  %s9 = scalar_select 0, %s8, %s6
  $region1: #{model_forward.1} parent=0
    #allocation2 [shape = 'u8[512]{0}', space=smem, size = 0x200, scoped, tag = 'input window, operand 0, single buffered']
    #allocation3 [shape = 's32[2]{0}', space=sflag, size = 0x8, scoped, tag = 'scoped memory for model_forward.1']
    #allocation4 [shape = 's32[2]{0}', space=sflag, size = 0x8, scoped, tag = 'scoped memory for model_forward.1']
    #allocation5 [shape = 'u8[512]{0}', space=smem, size = 0x200, scoped, tag = 'input window, operand 1, single buffered']
    #allocation6 [shape = 's32[1]{0}', space=sflag, size = 0x4, scoped, tag = 'scoped memory for model_forward.1']
    #allocation7 [shape = 'u8[512]{0}', space=smem, size = 0x200, scoped, tag = 'input window, operand 2, single buffered']
    #allocation8 [shape = 'u8[32768]{0}', space=vmem, size = 0x8000, scoped, tag = 'output window, operand 0']
    %10 = vsyncpa [#allocation4], 0
    %11 = vsyncpa [#allocation6], 0
    %12 = vsyncpa [#allocation3], 0
    %s13 = scalar_lea.sflag [#allocation3], 1
    %14 = vsyncpa %s13, 0
    loop: start=0, step=1, limit=4
    $region2: #{model_forward.1} parent=1 // loop_pre_header
      _
    $region3: #{model_forward.1} parent=1 // loop_header
      %s16 = sphi 0, %s20
      %p17 = scmp.ge.s32.totalorder %s16, 4
      %s24 = sphi 0, %s24
      %s26 = sphi 0, %s24
      %s27 = sphi 0, %s26
      %s41 = sphi 0, %s27
      %s45 = sphi 0, %s45
      %s47 = sphi 0, %s45
      %s48 = sphi 0, %s47
      %s62 = sphi 0, %s48
      %s66 = sphi 0, %s66
      %s68 = sphi 0, %s66
      %s69 = sphi 0, %s68
      %s83 = sphi 0, %s69
      %s89 = sphi 0, %s91
      %s92 = sphi 0, %s89
      %s93 = sphi 0, %s92
      %s109 = sphi 0, %s93
      %s113 = sphi 0, %s113
      %s115 = sphi 0, %s113
      %s116 = sphi 0, %s115
      %s130 = sphi 0, %s116
      %s136 = sphi 0, %s138
      %s139 = sphi 0, %s136
      %s140 = sphi 0, %s139
      %s156 = sphi 0, %s140
    $region4: #{model_forward.1} parent=1 // loop_header_branch
      %19 = sbr.rel (%p17) target = $region8
    $region5: #{model_forward.1} parent=1 // loop_body
      %s21 = ssub.s32 %s16, 1
      %s22 = ssub.s32 %s16, 2
      %s23 = sadd.s32 %s16, 1
      %s25 = sadd.s32 %s24, 1
      %p28 = scmp.eq.s32.totalorder %s16, 1
      %p29 = scmp.ne.s32.totalorder %s24, %s26
      %p30 = scmp.eq.s32.totalorder %s16, 0
      %p31 = por %p29, %p30
      %p32 = scmp.ne.s32.totalorder %s24, %s26
      %p33 = scmp.eq.s32.totalorder %s21, 1
      %p34 = por %p32, %p33
      %p35 = scmp.ne.s32.totalorder %s26, %s27
      %p36 = scmp.eq.s32.totalorder %s21, 0
      %p37 = por %p35, %p36
      %p38 = scmp.ne.s32.totalorder %s26, %s27
      %p39 = scmp.eq.s32.totalorder %s22, 1
      %p40 = por %p38, %p39
      %p42 = scmp.ne.s32.totalorder %s27, %s41
      %p43 = scmp.eq.s32.totalorder %s22, 0
      %p44 = por %p42, %p43
      %s46 = sadd.s32 %s45, 1
      %p49 = scmp.eq.s32.totalorder %s16, 1
      %p50 = scmp.ne.s32.totalorder %s45, %s47
      %p51 = scmp.eq.s32.totalorder %s16, 0
      %p52 = por %p50, %p51
      %p53 = scmp.ne.s32.totalorder %s45, %s47
      %p54 = scmp.eq.s32.totalorder %s21, 1
      %p55 = por %p53, %p54
      %p56 = scmp.ne.s32.totalorder %s47, %s48
      %p57 = scmp.eq.s32.totalorder %s21, 0
      %p58 = por %p56, %p57
      %p59 = scmp.ne.s32.totalorder %s47, %s48
      %p60 = scmp.eq.s32.totalorder %s22, 1
      %p61 = por %p59, %p60
      %p63 = scmp.ne.s32.totalorder %s48, %s62
      %p64 = scmp.eq.s32.totalorder %s22, 0
      %p65 = por %p63, %p64
      %s67 = sadd.s32 %s66, 1
      %p70 = scmp.eq.s32.totalorder %s16, 1
      %p71 = scmp.ne.s32.totalorder %s66, %s68
      %p72 = scmp.eq.s32.totalorder %s16, 0
      %p73 = por %p71, %p72
      %p74 = scmp.ne.s32.totalorder %s66, %s68
      %p75 = scmp.eq.s32.totalorder %s21, 1
      %p76 = por %p74, %p75
      %p77 = scmp.ne.s32.totalorder %s68, %s69
      %p78 = scmp.eq.s32.totalorder %s21, 0
      %p79 = por %p77, %p78
      %p80 = scmp.ne.s32.totalorder %s68, %s69
      %p81 = scmp.eq.s32.totalorder %s22, 1
      %p82 = por %p80, %p81
      %p84 = scmp.ne.s32.totalorder %s69, %s83
      %p85 = scmp.eq.s32.totalorder %s22, 0
      %p86 = por %p84, %p85
      %s87 = ssub.s32 %s16, %s23
      %p88 = scmp.eq.s32.totalorder %s87, 0
      %s90 = sadd.s32 %s89, 1
      %s91 = scalar_select %p88, %s89, %s90
      %p94 = pneg %p88
      %p95 = scmp.eq.s32.totalorder %s16, 1
      %p96 = por %p94, %p95
      %p97 = scmp.ne.s32.totalorder %s89, %s92
      %p98 = scmp.eq.s32.totalorder %s16, 0
      %p99 = por %p97, %p98
      %p100 = scmp.ne.s32.totalorder %s89, %s92
      %p101 = scmp.eq.s32.totalorder %s21, 1
      %p102 = por %p100, %p101
      %p103 = scmp.ne.s32.totalorder %s92, %s93
      %p104 = scmp.eq.s32.totalorder %s21, 0
      %p105 = por %p103, %p104
      %p106 = scmp.ne.s32.totalorder %s92, %s93
      %p107 = scmp.eq.s32.totalorder %s22, 1
      %p108 = por %p106, %p107
      %p110 = scmp.ne.s32.totalorder %s93, %s109
      %p111 = scmp.eq.s32.totalorder %s22, 0
      %p112 = por %p110, %p111
      %s114 = sadd.s32 %s113, 1
      %p117 = scmp.eq.s32.totalorder %s16, 1
      %p118 = scmp.ne.s32.totalorder %s113, %s115
      %p119 = scmp.eq.s32.totalorder %s16, 0
      %p120 = por %p118, %p119
      %p121 = scmp.ne.s32.totalorder %s113, %s115
      %p122 = scmp.eq.s32.totalorder %s21, 1
      %p123 = por %p121, %p122
      %p124 = scmp.ne.s32.totalorder %s115, %s116
      %p125 = scmp.eq.s32.totalorder %s21, 0
      %p126 = por %p124, %p125
      %p127 = scmp.ne.s32.totalorder %s115, %s116
      %p128 = scmp.eq.s32.totalorder %s22, 1
      %p129 = por %p127, %p128
      %p131 = scmp.ne.s32.totalorder %s116, %s130
      %p132 = scmp.eq.s32.totalorder %s22, 0
      %p133 = por %p131, %p132
      %s134 = ssub.s32 %s16, %s23
      %p135 = scmp.eq.s32.totalorder %s134, 0
      %s137 = sadd.s32 %s136, 1
      %s138 = scalar_select %p135, %s136, %s137
      %p141 = pneg %p135
      %p142 = scmp.eq.s32.totalorder %s16, 1
      %p143 = por %p141, %p142
      %p144 = scmp.ne.s32.totalorder %s136, %s139
      %p145 = scmp.eq.s32.totalorder %s16, 0
      %p146 = por %p144, %p145
      %p147 = scmp.ne.s32.totalorder %s136, %s139
      %p148 = scmp.eq.s32.totalorder %s21, 1
      %p149 = por %p147, %p148
      %p150 = scmp.ne.s32.totalorder %s139, %s140
      %p151 = scmp.eq.s32.totalorder %s21, 0
      %p152 = por %p150, %p151
      %p153 = scmp.ne.s32.totalorder %s139, %s140
      %p154 = scmp.eq.s32.totalorder %s22, 1
      %p155 = por %p153, %p154
      %p157 = scmp.ne.s32.totalorder %s140, %s156
      %p158 = scmp.eq.s32.totalorder %s22, 0
      %p159 = por %p157, %p158
      %p160 = scmp.le.s32.totalorder 1, %s16
      %p161 = scmp.lt.s32.totalorder %s16, 3
      %p162 = pnand %p160, %p161
      %p163 = pneg %p162
      // Predicated region
      $region9: #{model_forward.1} parent=5 // pred_check
        _
      $region10: #{model_forward.1} parent=5 // pred_check_branch
        %165 = sbr.rel (%p162) target = $region12
      $region11: #{model_forward.1} parent=5 // pred_region
        %s166 = ssub.s32 %s16, 1
        // Predicated region
        $region13: #{model_forward.1} parent=11 // pred_check
          %p167 = pneg %p37
        $region14: #{model_forward.1} parent=11 // pred_check_branch
          %169 = sbr.rel (%p167) target = $region16
        $region15: #{model_forward.1} parent=11 // pred_region
          %171 = vsyncadd [#allocation4], 0
          %s173 = sshll.u32 %s0, 4
          %s174 = int_to_ptr.vmem [resolvable:$true] %s173
          %176 = dma.vmem_to_smem %s174, 16, [#allocation2], [#allocation4]
        $region16: #{model_forward.1} parent=11 // pred_fallthru
          _
        // Predicated region
        $region17: #{model_forward.1} parent=11 // pred_check
          %p177 = pneg %p58
        $region18: #{model_forward.1} parent=11 // pred_check_branch
          %179 = sbr.rel (%p177) target = $region20
        $region19: #{model_forward.1} parent=11 // pred_region
          %181 = vsyncadd [#allocation6], 0
          %s183 = sshll.u32 %s1, 4
          %s184 = int_to_ptr.vmem [resolvable:$true] %s183
          %186 = dma.vmem_to_smem %s184, 16, [#allocation5], [#allocation6]
        $region20: #{model_forward.1} parent=11 // pred_fallthru
          _
        // Predicated region
        $region21: #{model_forward.1} parent=11 // pred_check
          %p187 = pneg %p79
        $region22: #{model_forward.1} parent=11 // pred_check_branch
          %189 = sbr.rel (%p187) target = $region24
        $region23: #{model_forward.1} parent=11 // pred_region
          %191 = vsyncadd [#allocation6], 0
          %s193 = sshll.u32 %s2, 4
          %s194 = int_to_ptr.vmem [resolvable:$true] %s193
          %196 = dma.vmem_to_smem %s194, 16, [#allocation7], [#allocation6]
        $region24: #{model_forward.1} parent=11 // pred_fallthru
          _
        // Predicated region
        $region25: #{model_forward.1} parent=11 // pred_check
          %p197 = pneg %p126
        $region26: #{model_forward.1} parent=11 // pred_check_branch
          %199 = sbr.rel (%p197) target = $region28
        $region27: #{model_forward.1} parent=11 // pred_region
          _
        $region28: #{model_forward.1} parent=11 // pred_fallthru
          _
      $region12: #{model_forward.1} parent=5 // pred_fallthru
        _
      %p200 = scmp.lt.s32.totalorder %s16, 2
      // Predicated region
      $region29: #{model_forward.1} parent=5 // pred_check
        %p201 = pneg %p200
      $region30: #{model_forward.1} parent=5 // pred_check_branch
        %203 = sbr.rel (%p201) target = $region32
      $region31: #{model_forward.1} parent=5 // pred_region
        // Predicated region
        $region33: #{model_forward.1} parent=31 // pred_check
          %p204 = pneg %p99
        $region34: #{model_forward.1} parent=31 // pred_check_branch
          %206 = sbr.rel (%p204) target = $region36
        $region35: #{model_forward.1} parent=31 // pred_region
          %s207 = smul.u32 4, %s16
          %p208 = scmp.lt.s32.totalorder %s207, 7
          %s209 = scalar_select %p208, %s207, 7
          %s210 = smul.addr %s209, 8
          %s211 = scalar_lea.vmem %s3, %s210
          %s212 = smul.u32 4, %s16
        $region36: #{model_forward.1} parent=31 // pred_fallthru
          _
      $region32: #{model_forward.1} parent=5 // pred_fallthru
        _
      %p213 = scmp.le.s32.totalorder 1, %s16
      %p214 = scmp.lt.s32.totalorder %s16, 3
      %p215 = pnand %p213, %p214
      %p216 = pneg %p215
      // Predicated region
      $region37: #{model_forward.1} parent=5 // pred_check
        _
      $region38: #{model_forward.1} parent=5 // pred_check_branch
        %218 = sbr.rel (%p215) target = $region40
      $region39: #{model_forward.1} parent=5 // pred_region
        %s219 = ssub.s32 %s16, 1
        // Predicated region
        $region41: #{model_forward.1} parent=39 // pred_check
          %p220 = pneg %p37
        $region42: #{model_forward.1} parent=39 // pred_check_branch
          %222 = sbr.rel (%p220) target = $region44
        $region43: #{model_forward.1} parent=39 // pred_region
          %224 = dma.done [#allocation4], 16
        $region44: #{model_forward.1} parent=39 // pred_fallthru
          _
        // Predicated region
        $region45: #{model_forward.1} parent=39 // pred_check
          %p225 = pneg %p58
        $region46: #{model_forward.1} parent=39 // pred_check_branch
          %227 = sbr.rel (%p225) target = $region48
        $region47: #{model_forward.1} parent=39 // pred_region
          %229 = dma.done [#allocation6], 16
        $region48: #{model_forward.1} parent=39 // pred_fallthru
          _
        // Predicated region
        $region49: #{model_forward.1} parent=39 // pred_check
          %p230 = pneg %p79
        $region50: #{model_forward.1} parent=39 // pred_check_branch
          %232 = sbr.rel (%p230) target = $region52
        $region51: #{model_forward.1} parent=39 // pred_region
          %234 = dma.done [#allocation6], 16
        $region52: #{model_forward.1} parent=39 // pred_fallthru
          _
        %235 = sfence
        %p236 = pneg %p37
        %p237 = pneg %p34
        %p238 = pneg %p58
        %p239 = pneg %p55
        %p240 = pneg %p79
        %p241 = pneg %p76
        %s242 = smul.u32 4, %s21
        %p243 = scmp.lt.s32.totalorder %s242, 7
        %s244 = scalar_select %p243, %s242, 7
        %s245 = smul.addr %s244, 8
        %s246 = scalar_lea.vmem %s3, %s245
        %p247 = pneg %p105
        %p248 = pneg %p102
        %p249 = pneg %p126
        %p250 = pneg %p123
        %p251 = pneg %p152
        %p252 = pneg %p149
        %s253 = sand.u32 %s139, 1
        %s254 = scalar_lea.sflag [#allocation3], %s253
        %s255 = sand.u32 %s139, 1
        %s256 = smul.addr %s255, 32
        %s257 = scalar_lea.vmem [#allocation8], %s256
        %s258 = smul.u32 4, %s21
        %p259 = scmp.lt.s32.totalorder %s258, 7
        %s260 = scalar_select %p259, %s258, 7
        %s261 = smul.addr %s260, 8
        %s262 = scalar_lea.vmem %s3, %s261
        %s263 = smul.u32 4, %s21
        %s264 = smul.u32 4, %s21
        %v265 = vld [vmem:[%s262] sm:$0xff]
        %v266 = vld [vmem:[%s262 + $0x8] sm:$0xff]
        %v267 = vld [vmem:[%s262 + $0x10] sm:$0xff]
        %v268 = vld [vmem:[%s262 + $0x18] sm:$0xff]
        %v269 = vpack.c.bf16 %v266, %v265
        %v270 = vpack.c.bf16 %v268, %v267
        %v271 = vld [vmem:[%s4] sm:$0xff]
        %v272 = vld [vmem:[%s4 + $0x8] sm:$0xf]
        %v273 = vld [vmem:[%s4 + $0xc] sm:$0xff]
        %v274 = vld [vmem:[%s4 + $0x14] sm:$0xf]
        %v275 = vld [vmem:[%s4 + $0x18] sm:$0xff]
        %v276 = vld [vmem:[%s4 + $0x20] sm:$0xf]
        %v277 = vld [vmem:[%s4 + $0x24] sm:$0xff]
        %v278 = vld [vmem:[%s4 + $0x2c] sm:$0xf]
        %v279 = vld [vmem:[%s4 + $0x30] sm:$0xff]
        %v280 = vld [vmem:[%s4 + $0x38] sm:$0xf]
        %v281 = vld [vmem:[%s4 + $0x3c] sm:$0xff]
        %v282 = vld [vmem:[%s4 + $0x44] sm:$0xf]
        %v283 = vld [vmem:[%s4 + $0x48] sm:$0xff]
        %v284 = vld [vmem:[%s4 + $0x50] sm:$0xf]
        %v285 = vld [vmem:[%s4 + $0x54] sm:$0xff]
        %v286 = vld [vmem:[%s4 + $0x5c] sm:$0xf]
        %v287 = vld [vmem:[%s4 + $0x60] sm:$0xff]
        %v288 = vld [vmem:[%s4 + $0x68] sm:$0xf]
        %v289 = vld [vmem:[%s4 + $0x6c] sm:$0xff]
        %v290 = vld [vmem:[%s4 + $0x74] sm:$0xf]
        %v291 = vld [vmem:[%s4 + $0x78] sm:$0xff]
        %v292 = vld [vmem:[%s4 + $0x80] sm:$0xf]
        %v293 = vld [vmem:[%s4 + $0x84] sm:$0xff]
        %v294 = vld [vmem:[%s4 + $0x8c] sm:$0xf]
        %v295 = vld [vmem:[%s4 + $0x90] sm:$0xff]
        %v296 = vld [vmem:[%s4 + $0x98] sm:$0xf]
        %v297 = vld [vmem:[%s4 + $0x9c] sm:$0xff]
        %v298 = vld [vmem:[%s4 + $0xa4] sm:$0xf]
        %v299 = vld [vmem:[%s4 + $0xa8] sm:$0xff]
        %v300 = vld [vmem:[%s4 + $0xb0] sm:$0xf]
        %v301 = vld [vmem:[%s4 + $0xb4] sm:$0xff]
        %v302 = vld [vmem:[%s4 + $0xbc] sm:$0xf]
        %v335 = vunpack.c.l.b16 %v271
        %v336 = vunpack.c.h.b16 %v271
        %v337 = vunpack.c.l.b16 %v272
        %v338 = vunpack.c.l.b16 %v273
        %v339 = vunpack.c.h.b16 %v273
        %v340 = vunpack.c.l.b16 %v274
        %v341 = vunpack.c.l.b16 %v275
        %v342 = vunpack.c.h.b16 %v275
        %v343 = vunpack.c.l.b16 %v276
        %v344 = vunpack.c.l.b16 %v277
        %v345 = vunpack.c.h.b16 %v277
        %v346 = vunpack.c.l.b16 %v278
        %v347 = vunpack.c.l.b16 %v279
        %v348 = vunpack.c.h.b16 %v279
        %v349 = vunpack.c.l.b16 %v280
        %v350 = vunpack.c.l.b16 %v281
        %v351 = vunpack.c.h.b16 %v281
        %v352 = vunpack.c.l.b16 %v282
        %v353 = vunpack.c.l.b16 %v283
        %v354 = vunpack.c.h.b16 %v283
        %v355 = vunpack.c.l.b16 %v284
        %v356 = vunpack.c.l.b16 %v285
        %v357 = vunpack.c.h.b16 %v285
        %v358 = vunpack.c.l.b16 %v286
        %v359 = vunpack.c.l.b16 %v287
        %v360 = vunpack.c.h.b16 %v287
        %v361 = vunpack.c.l.b16 %v288
        %v362 = vunpack.c.l.b16 %v289
        %v363 = vunpack.c.h.b16 %v289
        %v364 = vunpack.c.l.b16 %v290
        %v365 = vunpack.c.l.b16 %v291
        %v366 = vunpack.c.h.b16 %v291
        %v367 = vunpack.c.l.b16 %v292
        %v368 = vunpack.c.l.b16 %v293
        %v369 = vunpack.c.h.b16 %v293
        %v370 = vunpack.c.l.b16 %v294
        %v371 = vunpack.c.l.b16 %v295
        %v372 = vunpack.c.h.b16 %v295
        %v373 = vunpack.c.l.b16 %v296
        %v374 = vunpack.c.l.b16 %v297
        %v375 = vunpack.c.h.b16 %v297
        %v376 = vunpack.c.l.b16 %v298
        %v377 = vunpack.c.l.b16 %v299
        %v378 = vunpack.c.h.b16 %v299
        %v379 = vunpack.c.l.b16 %v300
        %v380 = vunpack.c.l.b16 %v301
        %v381 = vunpack.c.h.b16 %v301
        %v382 = vunpack.c.l.b16 %v302
        %v383 = vpack.c.b16 %v338, %v335
        %v384 = vpack.c.b16 %v339, %v336
        %v385 = vpack.c.b16 %v340, %v337
        %v386 = vpack.c.b16 %v344, %v341
        %v387 = vpack.c.b16 %v345, %v342
        %v388 = vpack.c.b16 %v346, %v343
        %v389 = vpack.c.b16 %v350, %v347
        %v390 = vpack.c.b16 %v351, %v348
        %v391 = vpack.c.b16 %v352, %v349
        %v392 = vpack.c.b16 %v356, %v353
        %v393 = vpack.c.b16 %v357, %v354
        %v394 = vpack.c.b16 %v358, %v355
        %v395 = vpack.c.b16 %v362, %v359
        %v396 = vpack.c.b16 %v363, %v360
        %v397 = vpack.c.b16 %v364, %v361
        %v398 = vpack.c.b16 %v368, %v365
        %v399 = vpack.c.b16 %v369, %v366
        %v400 = vpack.c.b16 %v370, %v367
        %v401 = vpack.c.b16 %v374, %v371
        %v402 = vpack.c.b16 %v375, %v372
        %v403 = vpack.c.b16 %v376, %v373
        %v404 = vpack.c.b16 %v380, %v377
        %v405 = vpack.c.b16 %v381, %v378
        %v406 = vpack.c.b16 %v382, %v379
        %431 = vmatpush.bf16.msra.mxu0 %v404
        %432 = vmatpush.bf16.msra.mxu0 %v401
        %433 = vmatpush.bf16.msra.mxu0 %v398
        %434 = vmatpush.bf16.msra.mxu0 %v395
        %435 = vmatpush.bf16.msra.mxu0 %v392
        %436 = vmatpush.bf16.msra.mxu0 %v389
        %437 = vmatpush.bf16.msra.mxu0 %v386
        %438 = vmatpush.bf16.msra.mxu0 %v383
        %439 = vmatmul.bf16.gmra.mxu0 %v269
        %v440 = vpop.f32.mrf.mxu0
        %v441 = vadd.f32 0.0, %v440
        %v442 = vpop.f32.mrf.mxu0
        %v443 = vadd.f32 0.0, %v442
        %444 = vmatmul.bf16.gmra.mxu0 %v270
        %v445 = vpop.f32.mrf.mxu0
        %v446 = vadd.f32 0.0, %v445
        %v447 = vpop.f32.mrf.mxu0
        %v448 = vadd.f32 0.0, %v447
        %449 = vdwg.mxu0
        %450 = vmatpush.bf16.msra.mxu0 %v405
        %451 = vmatpush.bf16.msra.mxu0 %v402
        %452 = vmatpush.bf16.msra.mxu0 %v399
        %453 = vmatpush.bf16.msra.mxu0 %v396
        %454 = vmatpush.bf16.msra.mxu0 %v393
        %455 = vmatpush.bf16.msra.mxu0 %v390
        %456 = vmatpush.bf16.msra.mxu0 %v387
        %457 = vmatpush.bf16.msra.mxu0 %v384
        %458 = vmatmul.bf16.gmra.mxu0 %v269
        %v459 = vpop.f32.mrf.mxu0
        %v460 = vadd.f32 0.0, %v459
        %v461 = vpop.f32.mrf.mxu0
        %v462 = vadd.f32 0.0, %v461
        %463 = vmatmul.bf16.gmra.mxu0 %v270
        %v464 = vpop.f32.mrf.mxu0
        %v465 = vadd.f32 0.0, %v464
        %v466 = vpop.f32.mrf.mxu0
        %v467 = vadd.f32 0.0, %v466
        %468 = vdwg.mxu0
        %469 = vmatpush.bf16.msra.mxu0 %v406
        %470 = vmatpush.bf16.msra.mxu0 %v403
        %471 = vmatpush.bf16.msra.mxu0 %v400
        %472 = vmatpush.bf16.msra.mxu0 %v397
        %473 = vmatpush.bf16.msra.mxu0 %v394
        %474 = vmatpush.bf16.msra.mxu0 %v391
        %475 = vmatpush.bf16.msra.mxu0 %v388
        %476 = vmatpush.bf16.msra.mxu0 %v385
        %477 = vmatmul.bf16.gmra.mxu0 %v269
        %v478 = vpop.f32.mrf.mxu0
        %v479 = vadd.f32 0.0, %v478
        %v480 = vpop.f32.mrf.mxu0
        %v481 = vadd.f32 0.0, %v480
        %482 = vmatmul.bf16.gmra.mxu0 %v270
        %v483 = vpop.f32.mrf.mxu0
        %v484 = vadd.f32 0.0, %v483
        %v485 = vpop.f32.mrf.mxu0
        %v486 = vadd.f32 0.0, %v485
        %487 = vdwg.mxu0
        %v488 = vrot.slane %v460, 1
        %v489 = vrot.slane %v462, 1
        %v490 = vlaneseq
        %v491 = vshrl.u32 %v490, 7
        %vm492 = vcmp.lt.s32.totalorder %v491, 7
        %v493 = vsel %vm492, %v488, %v489
        %v494 = vsel %vm492, %v489, %v488
        %v495 = vadd.f32 %v441, %v493
        %v496 = vadd.f32 %v443, %v494
        %v497 = vrot.slane %v479, 2
        %v498 = vrot.slane %v481, 2
        %vm499 = vcmp.lt.s32.totalorder %v491, 6
        %v500 = vsel %vm499, %v497, %v498
        %v501 = vsel %vm499, %v498, %v497
        %v502 = vadd.f32 %v495, %v500
        %v503 = vadd.f32 %v496, %v501
        %v504 = vrot.slane %v465, 1
        %v505 = vrot.slane %v467, 1
        %v506 = vsel %vm492, %v504, %v505
        %v507 = vsel %vm492, %v505, %v504
        %v508 = vadd.f32 %v446, %v506
        %v509 = vadd.f32 %v448, %v507
        %v510 = vrot.slane %v484, 2
        %v511 = vrot.slane %v486, 2
        %v512 = vsel %vm499, %v510, %v511
        %v513 = vsel %vm499, %v511, %v510
        %v514 = vadd.f32 %v508, %v512
        %v515 = vadd.f32 %v509, %v513
        %s516 = sld [smem:[#allocation2]]
        %s517 = sld [smem:[#allocation2 + $0x1]]
        %s518 = sld [smem:[#allocation2 + $0x2]]
        %s519 = sld [smem:[#allocation2 + $0x3]]
        %s520 = sld [smem:[#allocation2 + $0x4]]
        %s521 = sld [smem:[#allocation5]]
        %s522 = sld [smem:[#allocation5 + $0x1]]
        %s523 = sld [smem:[#allocation5 + $0x2]]
        %s524 = sld [smem:[#allocation5 + $0x3]]
        %s525 = sld [smem:[#allocation5 + $0x4]]
        %s526 = sld [smem:[#allocation7]]
        %s527 = sld [smem:[#allocation7 + $0x1]]
        %s528 = sld [smem:[#allocation7 + $0x2]]
        %s529 = sld [smem:[#allocation7 + $0x3]]
        %s530 = sld [smem:[#allocation7 + $0x4]]
        %v531 = vstv %s521
        %v532 = vmul.f32 %v531, %v502
        %v533 = vmul.f32 %v531, %v503
        %v534 = vmul.f32 %v531, %v514
        %v535 = vmul.f32 %v531, %v515
        %v536 = vstv %s526
        %v537 = vadd.f32 %v532, %v536
        %v538 = vadd.f32 %v533, %v536
        %v539 = vadd.f32 %v534, %v536
        %v540 = vadd.f32 %v535, %v536
        %v541 = vtanh.pop %v537
        %v542 = vtanh.pop %v538
        %v543 = vtanh.pop %v539
        %v544 = vtanh.pop %v540
        %v545 = vstv %s516
        %v546 = vmul.f32 %v545, %v541
        %v547 = vmul.f32 %v545, %v542
        %v548 = vmul.f32 %v545, %v543
        %v549 = vmul.f32 %v545, %v544
        %v550 = vstv %s522
        %v551 = vmul.f32 %v550, %v502
        %v552 = vmul.f32 %v550, %v503
        %v553 = vmul.f32 %v550, %v514
        %v554 = vmul.f32 %v550, %v515
        %v555 = vstv %s527
        %v556 = vadd.f32 %v551, %v555
        %v557 = vadd.f32 %v552, %v555
        %v558 = vadd.f32 %v553, %v555
        %v559 = vadd.f32 %v554, %v555
        %v560 = vtanh.pop %v556
        %v561 = vtanh.pop %v557
        %v562 = vtanh.pop %v558
        %v563 = vtanh.pop %v559
        %v564 = vstv %s517
        %v565 = vmul.f32 %v564, %v560
        %v566 = vmul.f32 %v564, %v561
        %v567 = vmul.f32 %v564, %v562
        %v568 = vmul.f32 %v564, %v563
        %v569 = vadd.f32 %v546, %v565
        %v570 = vadd.f32 %v547, %v566
        %v571 = vadd.f32 %v548, %v567
        %v572 = vadd.f32 %v549, %v568
        %v573 = vstv %s523
        %v574 = vmul.f32 %v573, %v502
        %v575 = vmul.f32 %v573, %v503
        %v576 = vmul.f32 %v573, %v514
        %v577 = vmul.f32 %v573, %v515
        %v578 = vstv %s528
        %v579 = vadd.f32 %v574, %v578
        %v580 = vadd.f32 %v575, %v578
        %v581 = vadd.f32 %v576, %v578
        %v582 = vadd.f32 %v577, %v578
        %v583 = vtanh.pop %v579
        %v584 = vtanh.pop %v580
        %v585 = vtanh.pop %v581
        %v586 = vtanh.pop %v582
        %v587 = vstv %s518
        %v588 = vmul.f32 %v587, %v583
        %v589 = vmul.f32 %v587, %v584
        %v590 = vmul.f32 %v587, %v585
        %v591 = vmul.f32 %v587, %v586
        %v592 = vadd.f32 %v569, %v588
        %v593 = vadd.f32 %v570, %v589
        %v594 = vadd.f32 %v571, %v590
        %v595 = vadd.f32 %v572, %v591
        %v596 = vstv %s524
        %v597 = vmul.f32 %v596, %v502
        %v598 = vmul.f32 %v596, %v503
        %v599 = vmul.f32 %v596, %v514
        %v600 = vmul.f32 %v596, %v515
        %v601 = vstv %s529
        %v602 = vadd.f32 %v597, %v601
        %v603 = vadd.f32 %v598, %v601
        %v604 = vadd.f32 %v599, %v601
        %v605 = vadd.f32 %v600, %v601
        %v606 = vtanh.pop %v602
        %v607 = vtanh.pop %v603
        %v608 = vtanh.pop %v604
        %v609 = vtanh.pop %v605
        %v610 = vstv %s519
        %v611 = vmul.f32 %v610, %v606
        %v612 = vmul.f32 %v610, %v607
        %v613 = vmul.f32 %v610, %v608
        %v614 = vmul.f32 %v610, %v609
        %v615 = vadd.f32 %v592, %v611
        %v616 = vadd.f32 %v593, %v612
        %v617 = vadd.f32 %v594, %v613
        %v618 = vadd.f32 %v595, %v614
        %v619 = vstv %s525
        %v620 = vmul.f32 %v619, %v502
        %v621 = vmul.f32 %v619, %v503
        %v622 = vmul.f32 %v619, %v514
        %v623 = vmul.f32 %v619, %v515
        %v624 = vstv %s530
        %v625 = vadd.f32 %v620, %v624
        %v626 = vadd.f32 %v621, %v624
        %v627 = vadd.f32 %v622, %v624
        %v628 = vadd.f32 %v623, %v624
        %v629 = vtanh.pop %v625
        %v630 = vtanh.pop %v626
        %v631 = vtanh.pop %v627
        %v632 = vtanh.pop %v628
        %v633 = vstv %s520
        %v634 = vmul.f32 %v633, %v629
        %v635 = vmul.f32 %v633, %v630
        %v636 = vmul.f32 %v633, %v631
        %v637 = vmul.f32 %v633, %v632
        %v638 = vadd.f32 %v615, %v634
        %v639 = vadd.f32 %v616, %v635
        %v640 = vadd.f32 %v617, %v636
        %v641 = vadd.f32 %v618, %v637
        %v642 = vadd.f32 %v638, %v265
        %v643 = vadd.f32 %v639, %v266
        %v644 = vadd.f32 %v640, %v267
        %v645 = vadd.f32 %v641, %v268
        %646 = vst [vmem:[%s257] sm:$0xff] %v642
        %647 = vst [vmem:[%s257 + $0x8] sm:$0xff] %v643
        %648 = vst [vmem:[%s257 + $0x10] sm:$0xff] %v644
        %649 = vst [vmem:[%s257 + $0x18] sm:$0xff] %v645
        %s650 = sand.u32 %s139, 1
        %s651 = scalar_lea.sflag [#allocation3], %s650
        %s652 = sand.u32 %s139, 1
        %s653 = smul.addr %s652, 32
        %s654 = scalar_lea.vmem [#allocation8], %s653
        // Predicated region
        $region53: #{model_forward.1} parent=39 // pred_check
          %p655 = pneg %p149
        $region54: #{model_forward.1} parent=39 // pred_check_branch
          %657 = sbr.rel (%p655) target = $region56
        $region55: #{model_forward.1} parent=39 // pred_region
          %s658 = smul.u32 4, %s21
          %660 = vsyncadd %s651, 0
          %s661 = smul.addr %s658, 8
          %s662 = scalar_lea.hbm %s5, %s661
          %s663 = sshll.u32 %s654, 4
          %s664 = int_to_ptr.vmem [resolvable:$true] %s663
          %s665 = sshll.u32 %s662, 4
          %s666 = int_to_ptr.hbm [resolvable:$true] %s665
          %671 = dma.vmem_to_hbm [thread:$0]  %s664, 512, %s666, %s651, 128, 128, 8
        $region56: #{model_forward.1} parent=39 // pred_fallthru
          _
      $region40: #{model_forward.1} parent=5 // pred_fallthru
        _
      %p672 = scmp.le.s32.totalorder 2, %s16
      // Predicated region
      $region57: #{model_forward.1} parent=5 // pred_check
        %p673 = pneg %p672
      $region58: #{model_forward.1} parent=5 // pred_check_branch
        %675 = sbr.rel (%p673) target = $region60
      $region59: #{model_forward.1} parent=5 // pred_region
        %s676 = ssub.s32 %s16, 2
        // Predicated region
        $region61: #{model_forward.1} parent=59 // pred_check
          %p677 = pneg %p155
        $region62: #{model_forward.1} parent=59 // pred_check_branch
          %679 = sbr.rel (%p677) target = $region64
        $region63: #{model_forward.1} parent=59 // pred_region
          %s680 = sand.u32 %s140, 1
          %s681 = scalar_lea.sflag [#allocation3], %s680
          %s682 = sand.u32 %s140, 1
          %s683 = smul.addr %s682, 32
          %s684 = scalar_lea.vmem [#allocation8], %s683
          %686 = dma.done %s681, 512
        $region64: #{model_forward.1} parent=59 // pred_fallthru
          _
      $region60: #{model_forward.1} parent=5 // pred_fallthru
        _
    $region6: #{model_forward.1} parent=1 // loop_footer
      %s20 = sadd.s32 1, %s16
    $region7: #{model_forward.1} parent=1 // loop_footer_branch
      %15 = sbr.rel target = $region3
    $region8: #{model_forward.1} parent=1 // loop_exit
      _
    %687 = vsyncpa [#allocation3], 1
    %s688 = scalar_lea.sflag [#allocation3], 1
    %689 = vsyncpa %s688, 1
    %690 = vsyncpa [#allocation4], 1
    %s691 = scalar_lea.sflag [#allocation4], 1
    %692 = vsyncpa %s691, 1
    %693 = vsyncpa [#allocation6], 1

</llo_original>
